<compile_context>
chip_gen: v5e
topology: v5e:2x2
jax: 0.10.0
libtpu: 0.0.40
codegen_flags: <defaults>
</compile_context>

<pallas_src>
import jax
import jax.numpy as jnp
from jax import lax
from jax.experimental import pallas as pl
from jax.experimental.pallas import tpu as pltpu


def _make_ce_kernel(n_true: int, tile_n: int):
    """Kernel closure over the true (unpadded) row count for last-tile masking."""
    ragged = (n_true % tile_n) != 0  # static: skip masking codegen entirely if clean

    def kernel(pred_ref, gt_ref, out_ref):
        # pred_ref: (TILE_N, C) logits (input dtype), gt_ref: (TILE_N, 1) int32,
        # out_ref:  (1, 8, 128) f32 — broadcasted per-tile partial sum.
        x = pred_ref[...]                                       # native dtype
        gt = gt_ref[...]                                        # (tn, 1) int32
        tn, c = x.shape

        # Row max in the native dtype (max is exact — no rounding).
        m = jnp.max(x, axis=-1, keepdims=True)                  # (tn, 1) native
        m32 = m.astype(jnp.float32)

        # exp/log path in f32 (transient (tn, c) f32, consumed by the reduce).
        ex = jnp.exp(x.astype(jnp.float32) - m32)               # (tn, c) f32
        lse = m32 + jnp.log(jnp.sum(ex, axis=-1, keepdims=True))  # (tn, 1) f32

        # Target logit via select-reduce in the NATIVE dtype: exactly one nonzero
        # per row, so the sum is exact even in bf16; upcast the (tn,1) result.
        class_ids = lax.broadcasted_iota(jnp.int32, (tn, c), 1)
        tgt_logit = jnp.sum(
            jnp.where(class_ids == gt, x, jnp.zeros((), dtype=x.dtype)),
            axis=-1, keepdims=True,
        ).astype(jnp.float32)                                   # (tn, 1) f32

        per_sample = lse - tgt_logit                            # (tn, 1) f32

        if ragged:
            # Only emitted when the last tile is ragged. Select-based masking is
            # required (NOT multiply-based): padded rows may read garbage
            # (Inf/NaN) from HBM and must not contaminate the sum.
            i = pl.program_id(0)
            row_ids = i * tn + lax.broadcasted_iota(jnp.int32, (tn, 1), 0)
            per_sample = jnp.where(row_ids < n_true, per_sample, 0.0)

        tile_sum = jnp.sum(per_sample)                          # scalar f32
        # lane-dense full-vreg store; wrapper reads [:, 0, 0]
        out_ref[...] = jnp.broadcast_to(tile_sum, (1, 8, 128))

    return kernel


def _choose_tile_n(n: int, c: int, itemsize: int) -> int:
    """Pick TILE_N: sublane-aligned, ~4 MiB of logits per buffer, capped at 2048 rows.

    Footprint per step (worst case, bf16 input):
      2 x 4 MiB double-buffered logits + 8 MiB f32 exp + 8 MiB i32 iota
      + O(tile_n*512B) (tn,1) vectors  ~< 28 MiB  -> fits v7x 64 MiB/TC.
    """
    sub = 16 if itemsize < 4 else 8          # bf16 packs 16 rows / sublane pair
    budget = 4 * 1024 * 1024                 # per logits buffer (Pallas double-buffers)
    t = max(sub, (budget // max(1, c * itemsize)) // sub * sub)
    t = min(t, 2048)                         # keeps the (tn,1) VMEM-padded gt/scratch bounded
    n_pad = ((n + sub - 1) // sub) * sub     # don't over-allocate for tiny N
    return max(sub, min(t, n_pad) // sub * sub)


def cross_entropy_loss(pred, gt, tile_n=None):
    """pred: (N, C) float logits; gt: (N,) int class indices in [0, C). Returns scalar f32."""
    n, c = pred.shape
    itemsize = jnp.dtype(pred.dtype).itemsize
    sub = 16 if itemsize < 4 else 8

    if tile_n is None:
        tile_n = _choose_tile_n(n, c, itemsize)
    else:
        tile_n = max(sub, (int(tile_n) // sub) * sub)

    num_tiles = pl.cdiv(n, tile_n)

    # (N, 1) int32 targets. Lane-padded in VMEM; acceptable at tile_n<=2048
    # (see lane-dense repack TODO at top of file).
    gt2d = gt.astype(jnp.int32).reshape(n, 1)

    cost = pl.CostEstimate(
        flops=6 * n * c,
        transcendentals=n * c,
        bytes_accessed=n * c * itemsize + n * 4 + num_tiles * 8 * 128 * 4,
    )

    out = pl.pallas_call(
        _make_ce_kernel(n, tile_n),
        out_shape=jax.ShapeDtypeStruct((num_tiles, 8, 128), jnp.float32),
        grid=(num_tiles,),
        in_specs=[
            pl.BlockSpec((tile_n, c), lambda i: (i, 0)),   # logits tile (native dtype)
            pl.BlockSpec((tile_n, 1), lambda i: (i, 0)),   # targets tile
        ],
        out_specs=pl.BlockSpec((1, 8, 128), lambda i: (i, 0, 0)),
        compiler_params=pltpu.CompilerParams(
            dimension_semantics=("parallel",),             # shard tiles across TCs (v7x)
            vmem_limit_bytes=48 * 1024 * 1024,             # v7x-safe ceiling; ample for v5e/v6e
        ),
        cost_estimate=cost,
    )(pred, gt2d)

    # final reduce + mean over the TRUE N in the wrapper (trivial XLA op)
    return jnp.sum(out[:, 0, 0]) / jnp.float32(n)


if __name__ == "__main__":
    key = jax.random.PRNGKey(0)
    k_pred, k_gt = jax.random.split(key)

    # small shapes; N=50 with tile_n=16 -> 4 tiles, last one ragged (exercises masking)
    N, C = 50, 32
    pred = jax.random.normal(k_pred, (N, C), dtype=jnp.float32)
    gt = jax.random.randint(k_gt, (N,), 0, C, dtype=jnp.int32)

    loss = cross_entropy_loss(pred, gt, tile_n=16)
    jax.block_until_ready(loss)

    ref = jnp.mean(jax.nn.logsumexp(pred, axis=-1) - pred[jnp.arange(N), gt])
    assert jnp.allclose(loss, ref, atol=1e-5, rtol=1e-5), (loss, ref)

    # bf16 path: logits stay bf16 through the DMA and the max/gather; exp path is f32
    pred_bf16 = pred.astype(jnp.bfloat16)
    loss_bf16 = cross_entropy_loss(pred_bf16, gt)          # default tile sizing (1 ragged tile)
    jax.block_until_ready(loss_bf16)
    pred_up = pred_bf16.astype(jnp.float32)
    ref_bf16 = jnp.mean(jax.nn.logsumexp(pred_up, axis=-1) - pred_up[jnp.arange(N), gt])
    assert jnp.allclose(loss_bf16, ref_bf16, atol=1e-3, rtol=1e-3), (loss_bf16, ref_bf16)

    print("KERNEL_OK")
</pallas_src>

<mosaic_0001>
module attributes {stable_mosaic.version = 11 : i64} {
  func.func @kernel(%arg0: i32, %arg1: memref<16x32xf32, #tpu.memory_space<vmem>>, %arg2: memref<16x1xi32, #tpu.memory_space<vmem>>, %arg3: memref<1x8x128xf32, #tpu.memory_space<vmem>>) attributes {dimension_semantics = [#tpu.dimension_semantics<parallel>], iteration_bounds = array<i64: 4>, scalar_prefetch = 0 : i64, scratch_operands = 0 : i64, tpu.core_type = #tpu.core_type<tc>, window_params = [{transform_indices = @transform_0, window_bounds = array<i64: 16, 32>}, {transform_indices = @transform_1, window_bounds = array<i64: 16, 1>}, {transform_indices = @transform_2, window_bounds = array<i64: 1, 8, 128>}]} {
    %c0 = arith.constant 0 : index
    %c0_0 = arith.constant 0 : index
    %0 = vector.load %arg1[%c0, %c0_0] : memref<16x32xf32, #tpu.memory_space<vmem>>, vector<16x32xf32>
    %c0_1 = arith.constant 0 : index
    %c0_2 = arith.constant 0 : index
    %1 = vector.load %arg2[%c0_1, %c0_2] : memref<16x1xi32, #tpu.memory_space<vmem>>, vector<16x1xi32>
    %cst = arith.constant dense<0xFF800000> : vector<16xf32>
    %2 = vector.multi_reduction <maximumf>, %0, %cst [1] : vector<16x32xf32> to vector<16xf32>
    %3 = vector.shape_cast %2 : vector<16xf32> to vector<16x1xf32>
    %4 = vector.broadcast %3 : vector<16x1xf32> to vector<16x32xf32>
    %5 = arith.subf %0, %4 : vector<16x32xf32>
    %6 = math.exp %5 : vector<16x32xf32>
    %cst_3 = arith.constant dense<0.000000e+00> : vector<16xf32>
    %7 = vector.multi_reduction <add>, %6, %cst_3 [1] : vector<16x32xf32> to vector<16xf32>
    %8 = vector.shape_cast %7 : vector<16xf32> to vector<16x1xf32>
    %9 = math.log %8 : vector<16x1xf32>
    %10 = arith.addf %3, %9 : vector<16x1xf32>
    %11 = tpu.iota {dimensions = array<i32: 1>} : vector<16x32xi32>
    %12 = vector.broadcast %1 : vector<16x1xi32> to vector<16x32xi32>
    %13 = arith.cmpi eq, %11, %12 : vector<16x32xi32>
    %cst_4 = arith.constant 0.000000e+00 : f32
    %14 = vector.broadcast %cst_4 : f32 to vector<16x32xf32>
    %15 = arith.select %13, %0, %14 : vector<16x32xi1>, vector<16x32xf32>
    %cst_5 = arith.constant dense<0.000000e+00> : vector<16xf32>
    %16 = vector.multi_reduction <add>, %15, %cst_5 [1] : vector<16x32xf32> to vector<16xf32>
    %17 = vector.shape_cast %16 : vector<16xf32> to vector<16x1xf32>
    %18 = arith.subf %10, %17 : vector<16x1xf32>
    %c16_i32 = arith.constant 16 : i32
    %19 = arith.muli %arg0, %c16_i32 : i32
    %20 = tpu.iota {dimensions = array<i32: 0>} : vector<16x1xi32>
    %21 = vector.broadcast %19 : i32 to vector<16x1xi32>
    %22 = arith.addi %21, %20 : vector<16x1xi32>
    %c50_i32 = arith.constant 50 : i32
    %23 = vector.broadcast %c50_i32 : i32 to vector<16x1xi32>
    %24 = arith.cmpi slt, %22, %23 : vector<16x1xi32>
    %cst_6 = arith.constant 0.000000e+00 : f32
    %25 = vector.broadcast %cst_6 : f32 to vector<16x1xf32>
    %26 = arith.select %24, %18, %25 : vector<16x1xi1>, vector<16x1xf32>
    %27 = vector.shape_cast %26 : vector<16x1xf32> to vector<1x16x1xf32>
    %cst_7 = arith.constant dense<0.000000e+00> : vector<1xf32>
    %28 = vector.multi_reduction <add>, %27, %cst_7 [1, 2] : vector<1x16x1xf32> to vector<1xf32>
    %29 = vector.shape_cast %28 : vector<1xf32> to vector<1x1x1xf32>
    %30 = vector.extract %29[0, 0, 0] : f32 from vector<1x1x1xf32>
    %31 = vector.broadcast %30 : f32 to vector<1x8x128xf32>
    %c0_8 = arith.constant 0 : index
    %c0_9 = arith.constant 0 : index
    %c0_10 = arith.constant 0 : index
    %32 = vector.load %arg3[%c0_8, %c0_9, %c0_10] : memref<1x8x128xf32, #tpu.memory_space<vmem>>, vector<1x8x128xf32>
    tpu.vector_store %arg3[%c0_8, %c0_9, %c0_10], %31 {strides = array<i32>} : memref<1x8x128xf32, #tpu.memory_space<vmem>>, vector<1x8x128xf32>,
    return
  }
  func.func @transform_0(%arg0: i32) -> (i32, i32) {
    %c0_i32 = arith.constant 0 : i32
    %c0_i32_0 = arith.constant 0 : i32
    return %arg0, %c0_i32 : i32, i32
  }
  func.func @transform_1(%arg0: i32) -> (i32, i32) {
    %c0_i32 = arith.constant 0 : i32
    %c0_i32_0 = arith.constant 0 : i32
    return %arg0, %c0_i32 : i32, i32
  }
  func.func @transform_2(%arg0: i32) -> (i32, i32, i32) {
    %c0_i32 = arith.constant 0 : i32
    %c0_i32_0 = arith.constant 0 : i32
    %c0_i32_1 = arith.constant 0 : i32
    return %arg0, %c0_i32, %c0_i32_0 : i32, i32, i32
  }
}

</mosaic_0001>

<llo_original>
// kernel: tpu_custom_call.1
$region0: #{tpu_custom_call.1}
  #allocation0 [shape = 'u32[]', space=smem, size = 0x4, offset = 0x4, fixed_abs, tag = 'smem constant byte address 0x4 - core index']
  #allocation1 [shape = 'u32[72,128]{1,0:T(1,128)}', space=vmem, size = 0x9000, scoped, tag = 'internal scratch']
  %s0 = inlined_call_operand.vmem [shape: f32[50,32], index: 0, kind: input, shape index: {}]
  %s1 = inlined_call_operand.vmem [shape: s32[50,1], index: 1, kind: input, shape index: {}]
  %s2 = inlined_call_operand.hbm [shape: f32[4,8,128], index: 2, kind: output, shape index: {}]
  %s3 = sld [smem:[#allocation0]]
  $region41: #{tpu_custom_call.1} parent=0
    _
  %s5 = ssub.s32 1, %s3
  %s6 = scalar_select 0, %s5, %s3
  $region1: #{tpu_custom_call.1} parent=0
    #allocation2 [shape = 'u8[8192]{0}', space=vmem, size = 0x2000, scoped, tag = 'output window, operand 0']
    #allocation3 [shape = 's32[2]{0}', space=sflag, size = 0x8, scoped, tag = 'scoped memory for tpu_custom_call.1']
    %7 = vsyncpa [#allocation3], 0
    %s8 = scalar_lea.sflag [#allocation3], 1
    %9 = vsyncpa %s8, 0
    loop: start=0, step=1, limit=6
    $region2: #{tpu_custom_call.1} parent=1 // loop_pre_header
      _
    $region3: #{tpu_custom_call.1} parent=1 // loop_header
      %s11 = sphi 0, %s15
      %p12 = scmp.ge.s32.totalorder %s11, 6
      %s21 = sphi 0, %s23
      %s24 = sphi 0, %s21
      %s25 = sphi 0, %s24
      %s41 = sphi 0, %s25
      %s47 = sphi 0, %s49
      %s50 = sphi 0, %s47
      %s51 = sphi 0, %s50
      %s67 = sphi 0, %s51
      %s73 = sphi 0, %s75
      %s76 = sphi 0, %s73
      %s77 = sphi 0, %s76
      %s93 = sphi 0, %s77
    $region4: #{tpu_custom_call.1} parent=1 // loop_header_branch
      %14 = sbr.rel (%p12) target = $region8
    $region5: #{tpu_custom_call.1} parent=1 // loop_body
      %s16 = ssub.s32 %s11, 1
      %s17 = ssub.s32 %s11, 2
      %s18 = sadd.s32 %s11, 1
      %s19 = ssub.s32 %s11, %s18
      %p20 = scmp.eq.s32.totalorder %s19, 0
      %s22 = sadd.s32 %s21, 1
      %s23 = scalar_select %p20, %s21, %s22
      %p26 = pneg %p20
      %p27 = scmp.eq.s32.totalorder %s11, 3
      %p28 = por %p26, %p27
      %p29 = scmp.ne.s32.totalorder %s21, %s24
      %p30 = scmp.eq.s32.totalorder %s11, 0
      %p31 = por %p29, %p30
      %p32 = scmp.ne.s32.totalorder %s21, %s24
      %p33 = scmp.eq.s32.totalorder %s16, 3
      %p34 = por %p32, %p33
      %p35 = scmp.ne.s32.totalorder %s24, %s25
      %p36 = scmp.eq.s32.totalorder %s16, 0
      %p37 = por %p35, %p36
      %p38 = scmp.ne.s32.totalorder %s24, %s25
      %p39 = scmp.eq.s32.totalorder %s17, 3
      %p40 = por %p38, %p39
      %p42 = scmp.ne.s32.totalorder %s25, %s41
      %p43 = scmp.eq.s32.totalorder %s17, 0
      %p44 = por %p42, %p43
      %s45 = ssub.s32 %s11, %s18
      %p46 = scmp.eq.s32.totalorder %s45, 0
      %s48 = sadd.s32 %s47, 1
      %s49 = scalar_select %p46, %s47, %s48
      %p52 = pneg %p46
      %p53 = scmp.eq.s32.totalorder %s11, 3
      %p54 = por %p52, %p53
      %p55 = scmp.ne.s32.totalorder %s47, %s50
      %p56 = scmp.eq.s32.totalorder %s11, 0
      %p57 = por %p55, %p56
      %p58 = scmp.ne.s32.totalorder %s47, %s50
      %p59 = scmp.eq.s32.totalorder %s16, 3
      %p60 = por %p58, %p59
      %p61 = scmp.ne.s32.totalorder %s50, %s51
      %p62 = scmp.eq.s32.totalorder %s16, 0
      %p63 = por %p61, %p62
      %p64 = scmp.ne.s32.totalorder %s50, %s51
      %p65 = scmp.eq.s32.totalorder %s17, 3
      %p66 = por %p64, %p65
      %p68 = scmp.ne.s32.totalorder %s51, %s67
      %p69 = scmp.eq.s32.totalorder %s17, 0
      %p70 = por %p68, %p69
      %s71 = ssub.s32 %s11, %s18
      %p72 = scmp.eq.s32.totalorder %s71, 0
      %s74 = sadd.s32 %s73, 1
      %s75 = scalar_select %p72, %s73, %s74
      %p78 = pneg %p72
      %p79 = scmp.eq.s32.totalorder %s11, 3
      %p80 = por %p78, %p79
      %p81 = scmp.ne.s32.totalorder %s73, %s76
      %p82 = scmp.eq.s32.totalorder %s11, 0
      %p83 = por %p81, %p82
      %p84 = scmp.ne.s32.totalorder %s73, %s76
      %p85 = scmp.eq.s32.totalorder %s16, 3
      %p86 = por %p84, %p85
      %p87 = scmp.ne.s32.totalorder %s76, %s77
      %p88 = scmp.eq.s32.totalorder %s16, 0
      %p89 = por %p87, %p88
      %p90 = scmp.ne.s32.totalorder %s76, %s77
      %p91 = scmp.eq.s32.totalorder %s17, 3
      %p92 = por %p90, %p91
      %p94 = scmp.ne.s32.totalorder %s77, %s93
      %p95 = scmp.eq.s32.totalorder %s17, 0
      %p96 = por %p94, %p95
      %p97 = scmp.le.s32.totalorder 1, %s11
      %p98 = scmp.lt.s32.totalorder %s11, 5
      %p99 = pnand %p97, %p98
      %p100 = pneg %p99
      // Predicated region
      $region9: #{tpu_custom_call.1} parent=5 // pred_check
        _
      $region10: #{tpu_custom_call.1} parent=5 // pred_check_branch
        %102 = sbr.rel (%p99) target = $region12
      $region11: #{tpu_custom_call.1} parent=5 // pred_region
        %s103 = ssub.s32 %s11, 1
      $region12: #{tpu_custom_call.1} parent=5 // pred_fallthru
        _
      %p104 = scmp.lt.s32.totalorder %s11, 4
      // Predicated region
      $region13: #{tpu_custom_call.1} parent=5 // pred_check
        %p105 = pneg %p104
      $region14: #{tpu_custom_call.1} parent=5 // pred_check_branch
        %107 = sbr.rel (%p105) target = $region16
      $region15: #{tpu_custom_call.1} parent=5 // pred_region
        // Predicated region
        $region17: #{tpu_custom_call.1} parent=15 // pred_check
          %p108 = pneg %p31
        $region18: #{tpu_custom_call.1} parent=15 // pred_check_branch
          %110 = sbr.rel (%p108) target = $region20
        $region19: #{tpu_custom_call.1} parent=15 // pred_region
          %s111 = smul.u32 2, %s11
          %s112 = ssub.s32 7, %s111
          %p113 = scmp.lt.s32.totalorder %s112, 2
          %s114 = scalar_select %p113, %s112, 2
          %s115 = smul.u32 8, %s114
          %p116 = scmp.lt.s32.totalorder %s111, 6
          %s117 = scalar_select %p116, %s111, 6
          %s118 = smul.addr %s117, 8
          %s119 = scalar_lea.vmem %s0, %s118
          %s120 = smul.u32 2, %s11
          %s121 = ssub.s32 7, %s120
          %p122 = scmp.lt.s32.totalorder %s121, 2
          %s123 = scalar_select %p122, %s121, 2
          %s124 = smul.u32 8, %s123
        $region20: #{tpu_custom_call.1} parent=15 // pred_fallthru
          _
        // Predicated region
        $region21: #{tpu_custom_call.1} parent=15 // pred_check
          %p125 = pneg %p57
        $region22: #{tpu_custom_call.1} parent=15 // pred_check_branch
          %127 = sbr.rel (%p125) target = $region24
        $region23: #{tpu_custom_call.1} parent=15 // pred_region
          %s128 = smul.u32 2, %s11
          %s129 = ssub.s32 7, %s128
          %p130 = scmp.lt.s32.totalorder %s129, 2
          %s131 = scalar_select %p130, %s129, 2
          %s132 = smul.u32 8, %s131
          %p133 = scmp.lt.s32.totalorder %s128, 6
          %s134 = scalar_select %p133, %s128, 6
          %s135 = smul.addr %s134, 8
          %s136 = scalar_lea.vmem %s1, %s135
          %s137 = smul.u32 2, %s11
          %s138 = ssub.s32 7, %s137
          %p139 = scmp.lt.s32.totalorder %s138, 2
          %s140 = scalar_select %p139, %s138, 2
          %s141 = smul.u32 8, %s140
        $region24: #{tpu_custom_call.1} parent=15 // pred_fallthru
          _
      $region16: #{tpu_custom_call.1} parent=5 // pred_fallthru
        _
      %p142 = scmp.le.s32.totalorder 1, %s11
      %p143 = scmp.lt.s32.totalorder %s11, 5
      %p144 = pnand %p142, %p143
      %p145 = pneg %p144
      // Predicated region
      $region25: #{tpu_custom_call.1} parent=5 // pred_check
        _
      $region26: #{tpu_custom_call.1} parent=5 // pred_check_branch
        %147 = sbr.rel (%p144) target = $region28
      $region27: #{tpu_custom_call.1} parent=5 // pred_region
        %s148 = ssub.s32 %s11, 1
        %s149 = smul.u32 2, %s16
        %s150 = ssub.s32 7, %s149
        %p151 = scmp.lt.s32.totalorder %s150, 2
        %s152 = scalar_select %p151, %s150, 2
        %s153 = smul.u32 8, %s152
        %p154 = scmp.lt.s32.totalorder %s149, 6
        %s155 = scalar_select %p154, %s149, 6
        %s156 = smul.addr %s155, 8
        %s157 = scalar_lea.vmem %s0, %s156
        %p158 = pneg %p37
        %p159 = pneg %p34
        %s160 = smul.u32 2, %s16
        %s161 = ssub.s32 7, %s160
        %p162 = scmp.lt.s32.totalorder %s161, 2
        %s163 = scalar_select %p162, %s161, 2
        %s164 = smul.u32 8, %s163
        %p165 = scmp.lt.s32.totalorder %s160, 6
        %s166 = scalar_select %p165, %s160, 6
        %s167 = smul.addr %s166, 8
        %s168 = scalar_lea.vmem %s1, %s167
        %p169 = pneg %p63
        %p170 = pneg %p60
        %p171 = pneg %p89
        %p172 = pneg %p86
        %s173 = sand.u32 %s76, 1
        %s174 = scalar_lea.sflag [#allocation3], %s173
        %s175 = sand.u32 %s76, 1
        %s176 = smul.addr %s175, 8
        %s177 = scalar_lea.vmem [#allocation2], %s176
        %s178 = smul.u32 2, %s16
        %s179 = ssub.s32 7, %s178
        %p180 = scmp.lt.s32.totalorder %s179, 2
        %s181 = scalar_select %p180, %s179, 2
        %s182 = smul.u32 8, %s181
        %p183 = scmp.lt.s32.totalorder %s178, 6
        %s184 = scalar_select %p183, %s178, 6
        %s185 = smul.addr %s184, 8
        %s186 = scalar_lea.vmem %s0, %s185
        %s187 = smul.u32 2, %s16
        %s188 = ssub.s32 7, %s187
        %p189 = scmp.lt.s32.totalorder %s188, 2
        %s190 = scalar_select %p189, %s188, 2
        %s191 = smul.u32 8, %s190
        %s192 = smul.u32 2, %s16
        %s193 = ssub.s32 7, %s192
        %p194 = scmp.lt.s32.totalorder %s193, 2
        %s195 = scalar_select %p194, %s193, 2
        %s196 = smul.u32 8, %s195
        %p197 = scmp.lt.s32.totalorder %s192, 6
        %s198 = scalar_select %p197, %s192, 6
        %s199 = smul.addr %s198, 8
        %s200 = scalar_lea.vmem %s1, %s199
        %s201 = smul.u32 2, %s16
        %s202 = ssub.s32 7, %s201
        %p203 = scmp.lt.s32.totalorder %s202, 2
        %s204 = scalar_select %p203, %s202, 2
        %s205 = smul.u32 8, %s204
        %v206 = vld [vmem:[%s186] sm:$0xff]
        %v207 = vld [vmem:[%s186 + $0x8] sm:$0xff]
        %v208 = vld [vmem:[%s200] sm:$0xff]
        %v209 = vld [vmem:[%s200 + $0x8] sm:$0xff]
        %vm210 = vcmask 261120
        %v211 = vsel %vm210, %v206, -inf
        %212 = vmax.xlane.f32.xlu0 %v211
        %v213 = vpop.xlane.xlu0 %212
        %v214 = vsel %vm210, %v207, -inf
        %215 = vmax.xlane.f32.xlu0 %v214
        %v216 = vpop.xlane.xlu0 %215
        %v217 = vsub.f32 %v206, %v213
        %v218 = vsub.f32 %v207, %v216
        %v219 = vmul.f32 %v217, 1.442695
        %v220 = vpow.pop %v219
        %v221 = vmul.f32 %v218, 1.442695
        %v222 = vpow.pop %v221
        %v223 = vsel %vm210, %v220, 0.0
        %224 = vadd.xlane.f32.xlu0 %v223
        %v225 = vpop.xlane.xlu0 %224
        %v226 = vsel %vm210, %v222, 0.0
        %227 = vadd.xlane.f32.xlu0 %v226
        %v228 = vpop.xlane.xlu0 %227
        %v229 = vlog2.pop %v225
        %v230 = vmul.f32 %v229, 0.6931472
        %v231 = vlog2.pop %v228
        %v232 = vmul.f32 %v231, 0.6931472
        %v233 = vadd.f32 %v213, %v230
        %v234 = vadd.f32 %v216, %v232
        %v235 = vlaneseq
        %v236 = vand.u32 %v235, 127
        %237 = vset.pattern.permute.xlu0 0
        %238 = vperm.xlu0 %237, %v208
        %v239 = vpop.permute.xlu0 %238
        %240 = vset.pattern.permute.xlu0 0
        %241 = vperm.xlu0 %240, %v209
        %v242 = vpop.permute.xlu0 %241
        %vm243 = vcmp.eq.s32.totalorder %v236, %v239
        %vm244 = vcmp.eq.s32.totalorder %v236, %v242
        %v245 = vsel %vm243, %v206, 0.0
        %v246 = vsel %vm244, %v207, 0.0
        %v247 = vsel %vm210, %v245, 0.0
        %248 = vadd.xlane.f32.xlu0 %v247
        %v249 = vpop.xlane.xlu0 %248
        %v250 = vsel %vm210, %v246, 0.0
        %251 = vadd.xlane.f32.xlu0 %v250
        %v252 = vpop.xlane.xlu0 %251
        %v253 = vsub.f32 %v233, %v249
        %v254 = vsub.f32 %v234, %v252
        %s255 = smul.u32 %s16, 16
        %v256 = vlaneseq
        %v257 = vshrl.u32 %v256, 7
        %v258 = vadd.s32 %v257, 8
        %v259 = vstv %s255
        %v260 = vadd.s32 %v259, %v257
        %v261 = vadd.s32 %v259, %v258
        %vm262 = vcmp.lt.s32.totalorder %v260, 50
        %vm263 = vcmp.lt.s32.totalorder %v261, 50
        %v264 = vsel %vm262, %v253, 0.0
        %v265 = vsel %vm263, %v254, 0.0
        %vm266 = vcmask 7168
        %v267 = vsel %vm266, %v264, 0.0
        %v268 = vsel %vm266, %v265, 0.0
        %v269 = vadd.f32 %v267, %v268
        %270 = vadd.xlane.f32.xlu0 %v269
        %v271 = vpop.xlane.xlu0 %270
        %v272 = vrot.slane %v271, 4
        %v273 = vadd.f32 %v271, %v272
        %v274 = vrot.slane %v273, 2
        %v275 = vadd.f32 %v273, %v274
        %v276 = vrot.slane %v275, 1
        %v277 = vadd.f32 %v275, %v276
        %s278 = vtos %v277
        %v279 = vstv %s278
        %280 = vst [vmem:[%s177] sm:$0xff] %v279
        %s281 = sand.u32 %s76, 1
        %s282 = scalar_lea.sflag [#allocation3], %s281
        %s283 = sand.u32 %s76, 1
        %s284 = smul.addr %s283, 8
        %s285 = scalar_lea.vmem [#allocation2], %s284
        // Predicated region
        $region29: #{tpu_custom_call.1} parent=27 // pred_check
          %p286 = pneg %p86
        $region30: #{tpu_custom_call.1} parent=27 // pred_check_branch
          %288 = sbr.rel (%p286) target = $region32
        $region31: #{tpu_custom_call.1} parent=27 // pred_region
          %290 = vsyncadd %s282, 0
          %s291 = smul.addr %s16, 8
          %s292 = scalar_lea.hbm %s2, %s291
          %s294 = sshll.u32 %s285, 4
          %s295 = int_to_ptr.vmem [resolvable:$true] %s294
          %s296 = sshll.u32 %s292, 4
          %s297 = int_to_ptr.hbm [resolvable:$true] %s296
          %299 = dma.vmem_to_hbm [thread:$0]  %s295, 128, %s297, %s282
        $region32: #{tpu_custom_call.1} parent=27 // pred_fallthru
          _
      $region28: #{tpu_custom_call.1} parent=5 // pred_fallthru
        _
      %p300 = scmp.le.s32.totalorder 2, %s11
      // Predicated region
      $region33: #{tpu_custom_call.1} parent=5 // pred_check
        %p301 = pneg %p300
      $region34: #{tpu_custom_call.1} parent=5 // pred_check_branch
        %303 = sbr.rel (%p301) target = $region36
      $region35: #{tpu_custom_call.1} parent=5 // pred_region
        %s304 = ssub.s32 %s11, 2
        // Predicated region
        $region37: #{tpu_custom_call.1} parent=35 // pred_check
          %p305 = pneg %p92
        $region38: #{tpu_custom_call.1} parent=35 // pred_check_branch
          %307 = sbr.rel (%p305) target = $region40
        $region39: #{tpu_custom_call.1} parent=35 // pred_region
          %s308 = sand.u32 %s77, 1
          %s309 = scalar_lea.sflag [#allocation3], %s308
          %s310 = sand.u32 %s77, 1
          %s311 = smul.addr %s310, 8
          %s312 = scalar_lea.vmem [#allocation2], %s311
          %314 = dma.done %s309, 128
        $region40: #{tpu_custom_call.1} parent=35 // pred_fallthru
          _
      $region36: #{tpu_custom_call.1} parent=5 // pred_fallthru
        _
    $region6: #{tpu_custom_call.1} parent=1 // loop_footer
      %s15 = sadd.s32 1, %s11
    $region7: #{tpu_custom_call.1} parent=1 // loop_footer_branch
      %10 = sbr.rel target = $region3
    $region8: #{tpu_custom_call.1} parent=1 // loop_exit
      _
    %315 = vsyncpa [#allocation3], 1
    %s316 = scalar_lea.sflag [#allocation3], 1
    %317 = vsyncpa %s316, 1

</llo_original>
